<compile_context>
chip_gen: v5e
topology: v5e:2x2
jax: 0.10.0
libtpu: 0.0.40
codegen_flags: <defaults>
</compile_context>

<pallas_src>
import jax
import jax.numpy as jnp
from jax.experimental import pallas as pl
from jax.experimental.pallas import tpu as pltpu


def _basic_block5x5_kernel(xp_ref, w1_ref, s1_ref, b1_ref,
                           w2_ref, s2_ref, b2_ref, o_ref, hp_ref):
    """One batch element.

    xp_ref : (Cin, L+2)      input, already zero-padded by 1 on each side
    w1_ref : (5, P, Cin)     conv1 weights, tap-major
    s1/b1  : (P, 1)          folded BN1 scale / bias
    w2_ref : (5, P, P)       conv2 weights, tap-major
    s2/b2  : (P, 1)          folded BN2 scale / bias
    o_ref  : (P, L-4)        output tile
    hp_ref : (P, L)          VMEM scratch: zero-padded conv1 activation
    """
    K = w1_ref.shape[0]                 # 5
    Lp = xp_ref.shape[-1]               # L + 2
    L1 = Lp - K + 1                     # L - 2  (conv1 output length)
    L2 = L1 - 2                         # L - 4  (conv2 output length)
    P = o_ref.shape[0]

    xp = xp_ref[...].astype(jnp.float32)

    # ---- conv1 (k=5, stride=1, pad already applied) as 5 MXU matmuls ----
    acc1 = jnp.zeros((P, L1), jnp.float32)
    for k in range(K):                                   # static unroll
        acc1 += jnp.dot(w1_ref[k], xp[:, k:k + L1],
                        preferred_element_type=jnp.float32)
    # folded BatchNorm1d + ReLU  (Dropout = identity at inference)
    h = jnp.maximum(acc1 * s1_ref[...] + b1_ref[...], 0.0)

    # ---- zero-pad h by 1 on each side of the length axis, in VMEM ----
    hp_ref[...] = jnp.zeros_like(hp_ref)
    hp_ref[:, 1:1 + L1] = h

    # ---- conv2 (k=5, stride=1, pad=1) as 5 MXU matmuls ----
    acc2 = jnp.zeros((P, L2), jnp.float32)
    for k in range(K):
        acc2 += jnp.dot(w2_ref[k], hp_ref[:, k:k + L2],
                        preferred_element_type=jnp.float32)
    out = jnp.maximum(acc2 * s2_ref[...] + b2_ref[...], 0.0)

    # ---- residual add: x[:, :, 0:-d]  (== xp[:, 1:1+L2]), final ReLU ----
    residual = xp[:, 1:1 + L2]
    o_ref[...] = jnp.maximum(residual + out, 0.0).astype(o_ref.dtype)


def basic_block_5x5(x, w1, g1, beta1, m1, v1, w2, g2, beta2, m2, v2,
                    *, eps=1e-5):
    """Inference forward of BasicBlock5x5 (stride=1, downsample=None)."""
    N, Cin, L = x.shape
    P, _, K = w1.shape
    assert w1.shape[1] == Cin and w2.shape == (P, P, K) and K == 5
    assert Cin == P, "residual add requires inplanes == planes (downsample=None)"

    # Fold BatchNorm (running stats) into per-channel scale / bias.
    s1 = (g1 / jnp.sqrt(v1 + eps)).astype(jnp.float32)
    b1 = (beta1 - m1 * s1).astype(jnp.float32)
    s2 = (g2 / jnp.sqrt(v2 + eps)).astype(jnp.float32)
    b2 = (beta2 - m2 * s2).astype(jnp.float32)
    s1, b1 = s1.reshape(P, 1), b1.reshape(P, 1)
    s2, b2 = s2.reshape(P, 1), b2.reshape(P, 1)

    # Tap-major weights: (K, Cout, Cin) so w[k] is a contiguous matmul operand.
    w1_t = jnp.transpose(w1, (2, 0, 1)).astype(jnp.float32)   # (5, P, Cin)
    w2_t = jnp.transpose(w2, (2, 0, 1)).astype(jnp.float32)   # (5, P, P)

    # Conv padding=1 applied once in the wrapper (cheap, keeps kernel simple).
    xp = jnp.pad(x.astype(jnp.float32), ((0, 0), (0, 0), (1, 1)))
    Lp = L + 2
    L1 = L - 2
    L2 = L - 4

    return pl.pallas_call(
        _basic_block5x5_kernel,
        out_shape=jax.ShapeDtypeStruct((N, P, L2), x.dtype),
        grid_spec=pltpu.PrefetchScalarGridSpec(
            num_scalar_prefetch=0,
            grid=(N,),
            in_specs=[
                pl.BlockSpec((None, Cin, Lp), lambda n: (n, 0, 0)),  # x (padded)
                pl.BlockSpec((K, P, Cin), lambda n: (0, 0, 0)),      # w1
                pl.BlockSpec((P, 1), lambda n: (0, 0)),              # bn1 scale
                pl.BlockSpec((P, 1), lambda n: (0, 0)),              # bn1 bias
                pl.BlockSpec((K, P, P), lambda n: (0, 0, 0)),        # w2
                pl.BlockSpec((P, 1), lambda n: (0, 0)),              # bn2 scale
                pl.BlockSpec((P, 1), lambda n: (0, 0)),              # bn2 bias
            ],
            out_specs=pl.BlockSpec((None, P, L2), lambda n: (n, 0, 0)),
            scratch_shapes=[pltpu.VMEM((P, L1 + 2), jnp.float32)],
        ),
        compiler_params=pltpu.CompilerParams(
            dimension_semantics=("parallel",),
        ),
    )(xp, w1_t, s1, b1, w2_t, s2, b2)


def _ref_forward(x, w1, g1, be1, m1, v1, w2, g2, be2, m2, v2, eps=1e-5):
    """Pure-JAX reference of BasicBlock5x5 (inference mode)."""
    def conv(a, w):
        return jax.lax.conv_general_dilated(
            a, w, window_strides=(1,), padding=[(1, 1)],
            dimension_numbers=("NCH", "OIH", "NCH"))

    def bn(a, g, b, m, v):
        g, b, m, v = (t[None, :, None] for t in (g, b, m, v))
        return (a - m) / jnp.sqrt(v + eps) * g + b

    h = jax.nn.relu(bn(conv(x, w1), g1, be1, m1, v1))
    out = jax.nn.relu(bn(conv(h, w2), g2, be2, m2, v2))
    d = x.shape[2] - out.shape[2]
    return jax.nn.relu(x[:, :, 0:-d] + out)


if __name__ == "__main__":
    key = jax.random.PRNGKey(0)
    ks = jax.random.split(key, 12)

    # Small shapes: batch=2, channels=16, length=132 (-> output length 128,
    # i.e. exactly one lane-dense 128-wide output tile).
    N, C, L = 2, 16, 132
    P, K = C, 5

    w1 = jax.random.normal(ks[0], (P, C, K), jnp.float32) / jnp.sqrt(C * K)
    g1 = 1.0 + 0.1 * jax.random.normal(ks[1], (P,), jnp.float32)
    be1 = 0.1 * jax.random.normal(ks[2], (P,), jnp.float32)
    m1 = 0.1 * jax.random.normal(ks[3], (P,), jnp.float32)
    v1 = 0.5 + jax.random.uniform(ks[4], (P,), jnp.float32)

    w2 = jax.random.normal(ks[5], (P, P, K), jnp.float32) / jnp.sqrt(P * K)
    g2 = 1.0 + 0.1 * jax.random.normal(ks[6], (P,), jnp.float32)
    be2 = 0.1 * jax.random.normal(ks[7], (P,), jnp.float32)
    m2 = 0.1 * jax.random.normal(ks[8], (P,), jnp.float32)
    v2 = 0.5 + jax.random.uniform(ks[9], (P,), jnp.float32)

    x = jax.random.normal(ks[10], (N, C, L), jnp.float32)

    out = basic_block_5x5(x, w1, g1, be1, m1, v1, w2, g2, be2, m2, v2)
    out = jax.block_until_ready(out)

    ref = _ref_forward(x, w1, g1, be1, m1, v1, w2, g2, be2, m2, v2)
    assert out.shape == ref.shape, (out.shape, ref.shape)
    assert jnp.allclose(out, ref, rtol=1e-4, atol=1e-4), \
        float(jnp.max(jnp.abs(out - ref)))

    print("KERNEL_OK")
</pallas_src>

<mosaic_0001>
module attributes {stable_mosaic.version = 11 : i64} {
  func.func @_basic_block5x5_kernel(%arg0: i32, %arg1: memref<1x16x134xf32, #tpu.memory_space<vmem>>, %arg2: memref<5x16x16xf32, #tpu.memory_space<vmem>>, %arg3: memref<16x1xf32, #tpu.memory_space<vmem>>, %arg4: memref<16x1xf32, #tpu.memory_space<vmem>>, %arg5: memref<5x16x16xf32, #tpu.memory_space<vmem>>, %arg6: memref<16x1xf32, #tpu.memory_space<vmem>>, %arg7: memref<16x1xf32, #tpu.memory_space<vmem>>, %arg8: memref<1x16x128xf32, #tpu.memory_space<vmem>>, %arg9: memref<16x132xf32, #tpu.memory_space<vmem>>) attributes {dimension_semantics = [#tpu.dimension_semantics<parallel>], iteration_bounds = array<i64: 2>, scalar_prefetch = 0 : i64, scratch_operands = 1 : i64, tpu.core_type = #tpu.core_type<tc>, window_params = [{transform_indices = @transform_0, window_bounds = array<i64: 1, 16, 134>}, {pipeline_mode = #tpu.pipeline_mode<synchronous>, transform_indices = @transform_1, window_bounds = array<i64: 5, 16, 16>}, {pipeline_mode = #tpu.pipeline_mode<synchronous>, transform_indices = @transform_2, window_bounds = array<i64: 16, 1>}, {pipeline_mode = #tpu.pipeline_mode<synchronous>, transform_indices = @transform_3, window_bounds = array<i64: 16, 1>}, {pipeline_mode = #tpu.pipeline_mode<synchronous>, transform_indices = @transform_4, window_bounds = array<i64: 5, 16, 16>}, {pipeline_mode = #tpu.pipeline_mode<synchronous>, transform_indices = @transform_5, window_bounds = array<i64: 16, 1>}, {pipeline_mode = #tpu.pipeline_mode<synchronous>, transform_indices = @transform_6, window_bounds = array<i64: 16, 1>}, {transform_indices = @transform_7, window_bounds = array<i64: 1, 16, 128>}]} {
    %c0 = arith.constant 0 : index
    %c0_0 = arith.constant 0 : index
    %c0_1 = arith.constant 0 : index
    %0 = vector.load %arg1[%c0, %c0_0, %c0_1] : memref<1x16x134xf32, #tpu.memory_space<vmem>>, vector<1x16x134xf32>
    %1 = vector.shape_cast %0 : vector<1x16x134xf32> to vector<16x134xf32>
    %cst = arith.constant 0.000000e+00 : f32
    %2 = vector.broadcast %cst : f32 to vector<16x130xf32>
    %c0_2 = arith.constant 0 : index
    %c0_3 = arith.constant 0 : index
    %c0_4 = arith.constant 0 : index
    %3 = vector.load %arg2[%c0_2, %c0_3, %c0_4] : memref<5x16x16xf32, #tpu.memory_space<vmem>>, vector<1x16x16xf32>
    %4 = vector.shape_cast %3 : vector<1x16x16xf32> to vector<16x16xf32>
    %5 = vector.extract_strided_slice %1 {offsets = [0, 0], sizes = [16, 130], strides = [1, 1]} : vector<16x134xf32> to vector<16x130xf32>
    %cst_5 = arith.constant dense<0.000000e+00> : vector<16x130xf32>
    %6 = tpu.matmul %4, %5, %cst_5 {dimension_numbers = #tpu.dot_dimension_numbers<[1], [0], [0], [1], [0, 0, 1, 1], [], []>} : vector<16x16xf32>, vector<16x130xf32>, vector<16x130xf32> -> vector<16x130xf32>
    %7 = arith.addf %2, %6 : vector<16x130xf32>
    %c1 = arith.constant 1 : index
    %c0_6 = arith.constant 0 : index
    %c0_7 = arith.constant 0 : index
    %8 = vector.load %arg2[%c1, %c0_6, %c0_7] : memref<5x16x16xf32, #tpu.memory_space<vmem>>, vector<1x16x16xf32>
    %9 = vector.shape_cast %8 : vector<1x16x16xf32> to vector<16x16xf32>
    %10 = vector.extract_strided_slice %1 {offsets = [0, 1], sizes = [16, 130], strides = [1, 1]} : vector<16x134xf32> to vector<16x130xf32>
    %cst_8 = arith.constant dense<0.000000e+00> : vector<16x130xf32>
    %11 = tpu.matmul %9, %10, %cst_8 {dimension_numbers = #tpu.dot_dimension_numbers<[1], [0], [0], [1], [0, 0, 1, 1], [], []>} : vector<16x16xf32>, vector<16x130xf32>, vector<16x130xf32> -> vector<16x130xf32>
    %12 = arith.addf %7, %11 : vector<16x130xf32>
    %c2 = arith.constant 2 : index
    %c0_9 = arith.constant 0 : index
    %c0_10 = arith.constant 0 : index
    %13 = vector.load %arg2[%c2, %c0_9, %c0_10] : memref<5x16x16xf32, #tpu.memory_space<vmem>>, vector<1x16x16xf32>
    %14 = vector.shape_cast %13 : vector<1x16x16xf32> to vector<16x16xf32>
    %15 = vector.extract_strided_slice %1 {offsets = [0, 2], sizes = [16, 130], strides = [1, 1]} : vector<16x134xf32> to vector<16x130xf32>
    %cst_11 = arith.constant dense<0.000000e+00> : vector<16x130xf32>
    %16 = tpu.matmul %14, %15, %cst_11 {dimension_numbers = #tpu.dot_dimension_numbers<[1], [0], [0], [1], [0, 0, 1, 1], [], []>} : vector<16x16xf32>, vector<16x130xf32>, vector<16x130xf32> -> vector<16x130xf32>
    %17 = arith.addf %12, %16 : vector<16x130xf32>
    %c3 = arith.constant 3 : index
    %c0_12 = arith.constant 0 : index
    %c0_13 = arith.constant 0 : index
    %18 = vector.load %arg2[%c3, %c0_12, %c0_13] : memref<5x16x16xf32, #tpu.memory_space<vmem>>, vector<1x16x16xf32>
    %19 = vector.shape_cast %18 : vector<1x16x16xf32> to vector<16x16xf32>
    %20 = vector.extract_strided_slice %1 {offsets = [0, 3], sizes = [16, 130], strides = [1, 1]} : vector<16x134xf32> to vector<16x130xf32>
    %cst_14 = arith.constant dense<0.000000e+00> : vector<16x130xf32>
    %21 = tpu.matmul %19, %20, %cst_14 {dimension_numbers = #tpu.dot_dimension_numbers<[1], [0], [0], [1], [0, 0, 1, 1], [], []>} : vector<16x16xf32>, vector<16x130xf32>, vector<16x130xf32> -> vector<16x130xf32>
    %22 = arith.addf %17, %21 : vector<16x130xf32>
    %c4 = arith.constant 4 : index
    %c0_15 = arith.constant 0 : index
    %c0_16 = arith.constant 0 : index
    %23 = vector.load %arg2[%c4, %c0_15, %c0_16] : memref<5x16x16xf32, #tpu.memory_space<vmem>>, vector<1x16x16xf32>
    %24 = vector.shape_cast %23 : vector<1x16x16xf32> to vector<16x16xf32>
    %25 = vector.extract_strided_slice %1 {offsets = [0, 4], sizes = [16, 130], strides = [1, 1]} : vector<16x134xf32> to vector<16x130xf32>
    %cst_17 = arith.constant dense<0.000000e+00> : vector<16x130xf32>
    %26 = tpu.matmul %24, %25, %cst_17 {dimension_numbers = #tpu.dot_dimension_numbers<[1], [0], [0], [1], [0, 0, 1, 1], [], []>} : vector<16x16xf32>, vector<16x130xf32>, vector<16x130xf32> -> vector<16x130xf32>
    %27 = arith.addf %22, %26 : vector<16x130xf32>
    %c0_18 = arith.constant 0 : index
    %c0_19 = arith.constant 0 : index
    %28 = vector.load %arg3[%c0_18, %c0_19] : memref<16x1xf32, #tpu.memory_space<vmem>>, vector<16x1xf32>
    %29 = vector.broadcast %28 : vector<16x1xf32> to vector<16x130xf32>
    %30 = arith.mulf %27, %29 : vector<16x130xf32>
    %c0_20 = arith.constant 0 : index
    %c0_21 = arith.constant 0 : index
    %31 = vector.load %arg4[%c0_20, %c0_21] : memref<16x1xf32, #tpu.memory_space<vmem>>, vector<16x1xf32>
    %32 = vector.broadcast %31 : vector<16x1xf32> to vector<16x130xf32>
    %33 = arith.addf %30, %32 : vector<16x130xf32>
    %cst_22 = arith.constant 0.000000e+00 : f32
    %34 = vector.broadcast %cst_22 : f32 to vector<16x130xf32>
    %35 = arith.maximumf %33, %34 : vector<16x130xf32>
    %cst_23 = arith.constant 0.000000e+00 : f32
    %36 = vector.broadcast %cst_23 : f32 to vector<16x132xf32>
    %c0_24 = arith.constant 0 : index
    %c0_25 = arith.constant 0 : index
    %37 = vector.load %arg9[%c0_24, %c0_25] : memref<16x132xf32, #tpu.memory_space<vmem>>, vector<16x132xf32>
    tpu.vector_store %arg9[%c0_24, %c0_25], %36 {strides = array<i32>} : memref<16x132xf32, #tpu.memory_space<vmem>>, vector<16x132xf32>,
    %c0_26 = arith.constant 0 : index
    %c1_27 = arith.constant 1 : index
    %38 = vector.load %arg9[%c0_26, %c1_27] : memref<16x132xf32, #tpu.memory_space<vmem>>, vector<16x130xf32>
    tpu.vector_store %arg9[%c0_26, %c1_27], %35 {strides = array<i32>} : memref<16x132xf32, #tpu.memory_space<vmem>>, vector<16x130xf32>,
    %cst_28 = arith.constant 0.000000e+00 : f32
    %39 = vector.broadcast %cst_28 : f32 to vector<16x128xf32>
    %c0_29 = arith.constant 0 : index
    %c0_30 = arith.constant 0 : index
    %c0_31 = arith.constant 0 : index
    %40 = vector.load %arg5[%c0_29, %c0_30, %c0_31] : memref<5x16x16xf32, #tpu.memory_space<vmem>>, vector<1x16x16xf32>
    %41 = vector.shape_cast %40 : vector<1x16x16xf32> to vector<16x16xf32>
    %c0_32 = arith.constant 0 : index
    %c0_33 = arith.constant 0 : index
    %42 = vector.load %arg9[%c0_32, %c0_33] : memref<16x132xf32, #tpu.memory_space<vmem>>, vector<16x128xf32>
    %cst_34 = arith.constant dense<0.000000e+00> : vector<16x128xf32>
    %43 = tpu.matmul %41, %42, %cst_34 {dimension_numbers = #tpu.dot_dimension_numbers<[1], [0], [0], [1], [0, 0, 1, 1], [], []>} : vector<16x16xf32>, vector<16x128xf32>, vector<16x128xf32> -> vector<16x128xf32>
    %44 = arith.addf %39, %43 : vector<16x128xf32>
    %c1_35 = arith.constant 1 : index
    %c0_36 = arith.constant 0 : index
    %c0_37 = arith.constant 0 : index
    %45 = vector.load %arg5[%c1_35, %c0_36, %c0_37] : memref<5x16x16xf32, #tpu.memory_space<vmem>>, vector<1x16x16xf32>
    %46 = vector.shape_cast %45 : vector<1x16x16xf32> to vector<16x16xf32>
    %c0_38 = arith.constant 0 : index
    %c1_39 = arith.constant 1 : index
    %47 = vector.load %arg9[%c0_38, %c1_39] : memref<16x132xf32, #tpu.memory_space<vmem>>, vector<16x128xf32>
    %cst_40 = arith.constant dense<0.000000e+00> : vector<16x128xf32>
    %48 = tpu.matmul %46, %47, %cst_40 {dimension_numbers = #tpu.dot_dimension_numbers<[1], [0], [0], [1], [0, 0, 1, 1], [], []>} : vector<16x16xf32>, vector<16x128xf32>, vector<16x128xf32> -> vector<16x128xf32>
    %49 = arith.addf %44, %48 : vector<16x128xf32>
    %c2_41 = arith.constant 2 : index
    %c0_42 = arith.constant 0 : index
    %c0_43 = arith.constant 0 : index
    %50 = vector.load %arg5[%c2_41, %c0_42, %c0_43] : memref<5x16x16xf32, #tpu.memory_space<vmem>>, vector<1x16x16xf32>
    %51 = vector.shape_cast %50 : vector<1x16x16xf32> to vector<16x16xf32>
    %c0_44 = arith.constant 0 : index
    %c2_45 = arith.constant 2 : index
    %52 = vector.load %arg9[%c0_44, %c2_45] : memref<16x132xf32, #tpu.memory_space<vmem>>, vector<16x128xf32>
    %cst_46 = arith.constant dense<0.000000e+00> : vector<16x128xf32>
    %53 = tpu.matmul %51, %52, %cst_46 {dimension_numbers = #tpu.dot_dimension_numbers<[1], [0], [0], [1], [0, 0, 1, 1], [], []>} : vector<16x16xf32>, vector<16x128xf32>, vector<16x128xf32> -> vector<16x128xf32>
    %54 = arith.addf %49, %53 : vector<16x128xf32>
    %c3_47 = arith.constant 3 : index
    %c0_48 = arith.constant 0 : index
    %c0_49 = arith.constant 0 : index
    %55 = vector.load %arg5[%c3_47, %c0_48, %c0_49] : memref<5x16x16xf32, #tpu.memory_space<vmem>>, vector<1x16x16xf32>
    %56 = vector.shape_cast %55 : vector<1x16x16xf32> to vector<16x16xf32>
    %c0_50 = arith.constant 0 : index
    %c3_51 = arith.constant 3 : index
    %57 = vector.load %arg9[%c0_50, %c3_51] : memref<16x132xf32, #tpu.memory_space<vmem>>, vector<16x128xf32>
    %cst_52 = arith.constant dense<0.000000e+00> : vector<16x128xf32>
    %58 = tpu.matmul %56, %57, %cst_52 {dimension_numbers = #tpu.dot_dimension_numbers<[1], [0], [0], [1], [0, 0, 1, 1], [], []>} : vector<16x16xf32>, vector<16x128xf32>, vector<16x128xf32> -> vector<16x128xf32>
    %59 = arith.addf %54, %58 : vector<16x128xf32>
    %c4_53 = arith.constant 4 : index
    %c0_54 = arith.constant 0 : index
    %c0_55 = arith.constant 0 : index
    %60 = vector.load %arg5[%c4_53, %c0_54, %c0_55] : memref<5x16x16xf32, #tpu.memory_space<vmem>>, vector<1x16x16xf32>
    %61 = vector.shape_cast %60 : vector<1x16x16xf32> to vector<16x16xf32>
    %c0_56 = arith.constant 0 : index
    %c4_57 = arith.constant 4 : index
    %62 = vector.load %arg9[%c0_56, %c4_57] : memref<16x132xf32, #tpu.memory_space<vmem>>, vector<16x128xf32>
    %cst_58 = arith.constant dense<0.000000e+00> : vector<16x128xf32>
    %63 = tpu.matmul %61, %62, %cst_58 {dimension_numbers = #tpu.dot_dimension_numbers<[1], [0], [0], [1], [0, 0, 1, 1], [], []>} : vector<16x16xf32>, vector<16x128xf32>, vector<16x128xf32> -> vector<16x128xf32>
    %64 = arith.addf %59, %63 : vector<16x128xf32>
    %c0_59 = arith.constant 0 : index
    %c0_60 = arith.constant 0 : index
    %65 = vector.load %arg6[%c0_59, %c0_60] : memref<16x1xf32, #tpu.memory_space<vmem>>, vector<16x1xf32>
    %66 = vector.broadcast %65 : vector<16x1xf32> to vector<16x128xf32>
    %67 = arith.mulf %64, %66 : vector<16x128xf32>
    %c0_61 = arith.constant 0 : index
    %c0_62 = arith.constant 0 : index
    %68 = vector.load %arg7[%c0_61, %c0_62] : memref<16x1xf32, #tpu.memory_space<vmem>>, vector<16x1xf32>
    %69 = vector.broadcast %68 : vector<16x1xf32> to vector<16x128xf32>
    %70 = arith.addf %67, %69 : vector<16x128xf32>
    %cst_63 = arith.constant 0.000000e+00 : f32
    %71 = vector.broadcast %cst_63 : f32 to vector<16x128xf32>
    %72 = arith.maximumf %70, %71 : vector<16x128xf32>
    %73 = vector.extract_strided_slice %1 {offsets = [0, 1], sizes = [16, 128], strides = [1, 1]} : vector<16x134xf32> to vector<16x128xf32>
    %74 = arith.addf %73, %72 : vector<16x128xf32>
    %cst_64 = arith.constant 0.000000e+00 : f32
    %75 = vector.broadcast %cst_64 : f32 to vector<16x128xf32>
    %76 = arith.maximumf %74, %75 : vector<16x128xf32>
    %c0_65 = arith.constant 0 : index
    %c0_66 = arith.constant 0 : index
    %c0_67 = arith.constant 0 : index
    %77 = vector.load %arg8[%c0_65, %c0_66, %c0_67] : memref<1x16x128xf32, #tpu.memory_space<vmem>>, vector<1x16x128xf32>
    %78 = vector.shape_cast %77 : vector<1x16x128xf32> to vector<16x128xf32>
    %79 = vector.shape_cast %76 : vector<16x128xf32> to vector<1x16x128xf32>
    tpu.vector_store %arg8[%c0_65, %c0_66, %c0_67], %79 {strides = array<i32>} : memref<1x16x128xf32, #tpu.memory_space<vmem>>, vector<1x16x128xf32>,
    return
  }
  func.func @transform_0(%arg0: i32) -> (i32, i32, i32) {
    %c0_i32 = arith.constant 0 : i32
    %c0_i32_0 = arith.constant 0 : i32
    %c0_i32_1 = arith.constant 0 : i32
    return %arg0, %c0_i32, %c0_i32_0 : i32, i32, i32
  }
  func.func @transform_1(%arg0: i32) -> (i32, i32, i32) {
    %c0_i32 = arith.constant 0 : i32
    %c0_i32_0 = arith.constant 0 : i32
    %c0_i32_1 = arith.constant 0 : i32
    %c0_i32_2 = arith.constant 0 : i32
    return %c0_i32, %c0_i32_0, %c0_i32_1 : i32, i32, i32
  }
  func.func @transform_2(%arg0: i32) -> (i32, i32) {
    %c0_i32 = arith.constant 0 : i32
    %c0_i32_0 = arith.constant 0 : i32
    %c0_i32_1 = arith.constant 0 : i32
    return %c0_i32, %c0_i32_0 : i32, i32
  }
  func.func @transform_3(%arg0: i32) -> (i32, i32) {
    %c0_i32 = arith.constant 0 : i32
    %c0_i32_0 = arith.constant 0 : i32
    %c0_i32_1 = arith.constant 0 : i32
    return %c0_i32, %c0_i32_0 : i32, i32
  }
  func.func @transform_4(%arg0: i32) -> (i32, i32, i32) {
    %c0_i32 = arith.constant 0 : i32
    %c0_i32_0 = arith.constant 0 : i32
    %c0_i32_1 = arith.constant 0 : i32
    %c0_i32_2 = arith.constant 0 : i32
    return %c0_i32, %c0_i32_0, %c0_i32_1 : i32, i32, i32
  }
  func.func @transform_5(%arg0: i32) -> (i32, i32) {
    %c0_i32 = arith.constant 0 : i32
    %c0_i32_0 = arith.constant 0 : i32
    %c0_i32_1 = arith.constant 0 : i32
    return %c0_i32, %c0_i32_0 : i32, i32
  }
  func.func @transform_6(%arg0: i32) -> (i32, i32) {
    %c0_i32 = arith.constant 0 : i32
    %c0_i32_0 = arith.constant 0 : i32
    %c0_i32_1 = arith.constant 0 : i32
    return %c0_i32, %c0_i32_0 : i32, i32
  }
  func.func @transform_7(%arg0: i32) -> (i32, i32, i32) {
    %c0_i32 = arith.constant 0 : i32
    %c0_i32_0 = arith.constant 0 : i32
    %c0_i32_1 = arith.constant 0 : i32
    return %arg0, %c0_i32, %c0_i32_0 : i32, i32, i32
  }
}

</mosaic_0001>

<llo_original>
// kernel: tpu_custom_call.1
$region0: #{tpu_custom_call.1}
  #allocation0 [shape = 'u32[]', space=smem, size = 0x4, offset = 0x4, fixed_abs, tag = 'smem constant byte address 0x4 - core index']
  #allocation1 [shape = 'u32[72,128]{1,0:T(1,128)}', space=vmem, size = 0x9000, scoped, tag = 'internal scratch']
  #allocation2 [shape = 'f32[16,132]{1,0:T(8,128)}', space=vmem, size = 0x4000, scoped, tag = 'scratch operand']
  %s0 = inlined_call_operand.hbm [shape: f32[2,16,134], index: 0, kind: input, shape index: {}]
  %s1 = inlined_call_operand.hbm [shape: f32[5,16,16], index: 1, kind: input, shape index: {}]
  %s2 = inlined_call_operand.vmem [shape: f32[16,1], index: 2, kind: input, shape index: {}]
  %s3 = inlined_call_operand.vmem [shape: f32[16,1], index: 3, kind: input, shape index: {}]
  %s4 = inlined_call_operand.hbm [shape: f32[5,16,16], index: 4, kind: input, shape index: {}]
  %s5 = inlined_call_operand.vmem [shape: f32[16,1], index: 5, kind: input, shape index: {}]
  %s6 = inlined_call_operand.vmem [shape: f32[16,1], index: 6, kind: input, shape index: {}]
  %s7 = inlined_call_operand.hbm [shape: f32[2,16,128], index: 7, kind: output, shape index: {}]
  %s8 = sld [smem:[#allocation0]]
  $region73: #{tpu_custom_call.1} parent=0
    _
  %s10 = ssub.s32 1, %s8
  %s11 = scalar_select 0, %s10, %s8
  $region1: #{tpu_custom_call.1} parent=0
    #allocation3 [shape = 'u8[32768]{0}', space=vmem, size = 0x8000, scoped, tag = 'input window, operand 0']
    #allocation4 [shape = 's32[2]{0}', space=sflag, size = 0x8, scoped, tag = 'scoped memory for tpu_custom_call.1']
    #allocation5 [shape = 's32[2]{0}', space=sflag, size = 0x8, scoped, tag = 'scoped memory for tpu_custom_call.1']
    #allocation6 [shape = 'u8[40960]{0}', space=vmem, size = 0xa000, scoped, tag = 'input window, operand 1, single buffered']
    #allocation7 [shape = 's32[1]{0}', space=sflag, size = 0x4, scoped, tag = 'scoped memory for tpu_custom_call.1']
    #allocation8 [shape = 'u8[40960]{0}', space=vmem, size = 0xa000, scoped, tag = 'input window, operand 4, single buffered']
    #allocation9 [shape = 'u8[16384]{0}', space=vmem, size = 0x4000, scoped, tag = 'output window, operand 0']
    %12 = vsyncpa [#allocation4], 0
    %s13 = scalar_lea.sflag [#allocation4], 1
    %14 = vsyncpa %s13, 0
    %15 = vsyncpa [#allocation7], 0
    %16 = vsyncpa [#allocation5], 0
    %s17 = scalar_lea.sflag [#allocation5], 1
    %18 = vsyncpa %s17, 0
    loop: start=0, step=1, limit=4
    $region2: #{tpu_custom_call.1} parent=1 // loop_pre_header
      _
    $region3: #{tpu_custom_call.1} parent=1 // loop_header
      %s20 = sphi 0, %s24
      %p21 = scmp.ge.s32.totalorder %s20, 4
      %s30 = sphi 0, %s32
      %s33 = sphi 0, %s30
      %s34 = sphi 0, %s33
      %s50 = sphi 0, %s34
      %s54 = sphi 0, %s54
      %s56 = sphi 0, %s54
      %s57 = sphi 0, %s56
      %s71 = sphi 0, %s57
      %s75 = sphi 0, %s75
      %s77 = sphi 0, %s75
      %s78 = sphi 0, %s77
      %s92 = sphi 0, %s78
      %s96 = sphi 0, %s96
      %s98 = sphi 0, %s96
      %s99 = sphi 0, %s98
      %s113 = sphi 0, %s99
      %s117 = sphi 0, %s117
      %s119 = sphi 0, %s117
      %s120 = sphi 0, %s119
      %s134 = sphi 0, %s120
      %s138 = sphi 0, %s138
      %s140 = sphi 0, %s138
      %s141 = sphi 0, %s140
      %s155 = sphi 0, %s141
      %s159 = sphi 0, %s159
      %s161 = sphi 0, %s159
      %s162 = sphi 0, %s161
      %s176 = sphi 0, %s162
      %s182 = sphi 0, %s184
      %s185 = sphi 0, %s182
      %s186 = sphi 0, %s185
      %s202 = sphi 0, %s186
    $region4: #{tpu_custom_call.1} parent=1 // loop_header_branch
      %23 = sbr.rel (%p21) target = $region8
    $region5: #{tpu_custom_call.1} parent=1 // loop_body
      %s25 = ssub.s32 %s20, 1
      %s26 = ssub.s32 %s20, 2
      %s27 = sadd.s32 %s20, 1
      %s28 = ssub.s32 %s20, %s27
      %p29 = scmp.eq.s32.totalorder %s28, 0
      %s31 = sadd.s32 %s30, 1
      %s32 = scalar_select %p29, %s30, %s31
      %p35 = pneg %p29
      %p36 = scmp.eq.s32.totalorder %s20, 1
      %p37 = por %p35, %p36
      %p38 = scmp.ne.s32.totalorder %s30, %s33
      %p39 = scmp.eq.s32.totalorder %s20, 0
      %p40 = por %p38, %p39
      %p41 = scmp.ne.s32.totalorder %s30, %s33
      %p42 = scmp.eq.s32.totalorder %s25, 1
      %p43 = por %p41, %p42
      %p44 = scmp.ne.s32.totalorder %s33, %s34
      %p45 = scmp.eq.s32.totalorder %s25, 0
      %p46 = por %p44, %p45
      %p47 = scmp.ne.s32.totalorder %s33, %s34
      %p48 = scmp.eq.s32.totalorder %s26, 1
      %p49 = por %p47, %p48
      %p51 = scmp.ne.s32.totalorder %s34, %s50
      %p52 = scmp.eq.s32.totalorder %s26, 0
      %p53 = por %p51, %p52
      %s55 = sadd.s32 %s54, 1
      %p58 = scmp.eq.s32.totalorder %s20, 1
      %p59 = scmp.ne.s32.totalorder %s54, %s56
      %p60 = scmp.eq.s32.totalorder %s20, 0
      %p61 = por %p59, %p60
      %p62 = scmp.ne.s32.totalorder %s54, %s56
      %p63 = scmp.eq.s32.totalorder %s25, 1
      %p64 = por %p62, %p63
      %p65 = scmp.ne.s32.totalorder %s56, %s57
      %p66 = scmp.eq.s32.totalorder %s25, 0
      %p67 = por %p65, %p66
      %p68 = scmp.ne.s32.totalorder %s56, %s57
      %p69 = scmp.eq.s32.totalorder %s26, 1
      %p70 = por %p68, %p69
      %p72 = scmp.ne.s32.totalorder %s57, %s71
      %p73 = scmp.eq.s32.totalorder %s26, 0
      %p74 = por %p72, %p73
      %s76 = sadd.s32 %s75, 1
      %p79 = scmp.eq.s32.totalorder %s20, 1
      %p80 = scmp.ne.s32.totalorder %s75, %s77
      %p81 = scmp.eq.s32.totalorder %s20, 0
      %p82 = por %p80, %p81
      %p83 = scmp.ne.s32.totalorder %s75, %s77
      %p84 = scmp.eq.s32.totalorder %s25, 1
      %p85 = por %p83, %p84
      %p86 = scmp.ne.s32.totalorder %s77, %s78
      %p87 = scmp.eq.s32.totalorder %s25, 0
      %p88 = por %p86, %p87
      %p89 = scmp.ne.s32.totalorder %s77, %s78
      %p90 = scmp.eq.s32.totalorder %s26, 1
      %p91 = por %p89, %p90
      %p93 = scmp.ne.s32.totalorder %s78, %s92
      %p94 = scmp.eq.s32.totalorder %s26, 0
      %p95 = por %p93, %p94
      %s97 = sadd.s32 %s96, 1
      %p100 = scmp.eq.s32.totalorder %s20, 1
      %p101 = scmp.ne.s32.totalorder %s96, %s98
      %p102 = scmp.eq.s32.totalorder %s20, 0
      %p103 = por %p101, %p102
      %p104 = scmp.ne.s32.totalorder %s96, %s98
      %p105 = scmp.eq.s32.totalorder %s25, 1
      %p106 = por %p104, %p105
      %p107 = scmp.ne.s32.totalorder %s98, %s99
      %p108 = scmp.eq.s32.totalorder %s25, 0
      %p109 = por %p107, %p108
      %p110 = scmp.ne.s32.totalorder %s98, %s99
      %p111 = scmp.eq.s32.totalorder %s26, 1
      %p112 = por %p110, %p111
      %p114 = scmp.ne.s32.totalorder %s99, %s113
      %p115 = scmp.eq.s32.totalorder %s26, 0
      %p116 = por %p114, %p115
      %s118 = sadd.s32 %s117, 1
      %p121 = scmp.eq.s32.totalorder %s20, 1
      %p122 = scmp.ne.s32.totalorder %s117, %s119
      %p123 = scmp.eq.s32.totalorder %s20, 0
      %p124 = por %p122, %p123
      %p125 = scmp.ne.s32.totalorder %s117, %s119
      %p126 = scmp.eq.s32.totalorder %s25, 1
      %p127 = por %p125, %p126
      %p128 = scmp.ne.s32.totalorder %s119, %s120
      %p129 = scmp.eq.s32.totalorder %s25, 0
      %p130 = por %p128, %p129
      %p131 = scmp.ne.s32.totalorder %s119, %s120
      %p132 = scmp.eq.s32.totalorder %s26, 1
      %p133 = por %p131, %p132
      %p135 = scmp.ne.s32.totalorder %s120, %s134
      %p136 = scmp.eq.s32.totalorder %s26, 0
      %p137 = por %p135, %p136
      %s139 = sadd.s32 %s138, 1
      %p142 = scmp.eq.s32.totalorder %s20, 1
      %p143 = scmp.ne.s32.totalorder %s138, %s140
      %p144 = scmp.eq.s32.totalorder %s20, 0
      %p145 = por %p143, %p144
      %p146 = scmp.ne.s32.totalorder %s138, %s140
      %p147 = scmp.eq.s32.totalorder %s25, 1
      %p148 = por %p146, %p147
      %p149 = scmp.ne.s32.totalorder %s140, %s141
      %p150 = scmp.eq.s32.totalorder %s25, 0
      %p151 = por %p149, %p150
      %p152 = scmp.ne.s32.totalorder %s140, %s141
      %p153 = scmp.eq.s32.totalorder %s26, 1
      %p154 = por %p152, %p153
      %p156 = scmp.ne.s32.totalorder %s141, %s155
      %p157 = scmp.eq.s32.totalorder %s26, 0
      %p158 = por %p156, %p157
      %s160 = sadd.s32 %s159, 1
      %p163 = scmp.eq.s32.totalorder %s20, 1
      %p164 = scmp.ne.s32.totalorder %s159, %s161
      %p165 = scmp.eq.s32.totalorder %s20, 0
      %p166 = por %p164, %p165
      %p167 = scmp.ne.s32.totalorder %s159, %s161
      %p168 = scmp.eq.s32.totalorder %s25, 1
      %p169 = por %p167, %p168
      %p170 = scmp.ne.s32.totalorder %s161, %s162
      %p171 = scmp.eq.s32.totalorder %s25, 0
      %p172 = por %p170, %p171
      %p173 = scmp.ne.s32.totalorder %s161, %s162
      %p174 = scmp.eq.s32.totalorder %s26, 1
      %p175 = por %p173, %p174
      %p177 = scmp.ne.s32.totalorder %s162, %s176
      %p178 = scmp.eq.s32.totalorder %s26, 0
      %p179 = por %p177, %p178
      %s180 = ssub.s32 %s20, %s27
      %p181 = scmp.eq.s32.totalorder %s180, 0
      %s183 = sadd.s32 %s182, 1
      %s184 = scalar_select %p181, %s182, %s183
      %p187 = pneg %p181
      %p188 = scmp.eq.s32.totalorder %s20, 1
      %p189 = por %p187, %p188
      %p190 = scmp.ne.s32.totalorder %s182, %s185
      %p191 = scmp.eq.s32.totalorder %s20, 0
      %p192 = por %p190, %p191
      %p193 = scmp.ne.s32.totalorder %s182, %s185
      %p194 = scmp.eq.s32.totalorder %s25, 1
      %p195 = por %p193, %p194
      %p196 = scmp.ne.s32.totalorder %s185, %s186
      %p197 = scmp.eq.s32.totalorder %s25, 0
      %p198 = por %p196, %p197
      %p199 = scmp.ne.s32.totalorder %s185, %s186
      %p200 = scmp.eq.s32.totalorder %s26, 1
      %p201 = por %p199, %p200
      %p203 = scmp.ne.s32.totalorder %s186, %s202
      %p204 = scmp.eq.s32.totalorder %s26, 0
      %p205 = por %p203, %p204
      %p206 = scmp.le.s32.totalorder 1, %s20
      %p207 = scmp.lt.s32.totalorder %s20, 3
      %p208 = pnand %p206, %p207
      %p209 = pneg %p208
      // Predicated region
      $region9: #{tpu_custom_call.1} parent=5 // pred_check
        _
      $region10: #{tpu_custom_call.1} parent=5 // pred_check_branch
        %211 = sbr.rel (%p208) target = $region12
      $region11: #{tpu_custom_call.1} parent=5 // pred_region
        %s212 = ssub.s32 %s20, 1
        // Predicated region
        $region13: #{tpu_custom_call.1} parent=11 // pred_check
          %p213 = pneg %p67
        $region14: #{tpu_custom_call.1} parent=11 // pred_check_branch
          %215 = sbr.rel (%p213) target = $region16
        $region15: #{tpu_custom_call.1} parent=11 // pred_region
          %217 = vsyncadd [#allocation7], 0
          %s218 = sshll.u32 %s1, 4
          %s219 = int_to_ptr.hbm [resolvable:$true] %s218
          %s220 = sshll.u32 [#allocation6], 4
          %s221 = int_to_ptr.vmem [resolvable:$true] %s220
          %226 = dma.hbm_to_vmem [thread:$0]  %s219, 1280, %s221, [#allocation7], 128, 128, 8
        $region16: #{tpu_custom_call.1} parent=11 // pred_fallthru
          _
        // Predicated region
        $region17: #{tpu_custom_call.1} parent=11 // pred_check
          %p227 = pneg %p88
        $region18: #{tpu_custom_call.1} parent=11 // pred_check_branch
          %229 = sbr.rel (%p227) target = $region20
        $region19: #{tpu_custom_call.1} parent=11 // pred_region
          _
        $region20: #{tpu_custom_call.1} parent=11 // pred_fallthru
          _
        // Predicated region
        $region21: #{tpu_custom_call.1} parent=11 // pred_check
          %p230 = pneg %p109
        $region22: #{tpu_custom_call.1} parent=11 // pred_check_branch
          %232 = sbr.rel (%p230) target = $region24
        $region23: #{tpu_custom_call.1} parent=11 // pred_region
          _
        $region24: #{tpu_custom_call.1} parent=11 // pred_fallthru
          _
        // Predicated region
        $region25: #{tpu_custom_call.1} parent=11 // pred_check
          %p233 = pneg %p130
        $region26: #{tpu_custom_call.1} parent=11 // pred_check_branch
          %235 = sbr.rel (%p233) target = $region28
        $region27: #{tpu_custom_call.1} parent=11 // pred_region
          %237 = vsyncadd [#allocation7], 0
          %s238 = sshll.u32 %s4, 4
          %s239 = int_to_ptr.hbm [resolvable:$true] %s238
          %s240 = sshll.u32 [#allocation8], 4
          %s241 = int_to_ptr.vmem [resolvable:$true] %s240
          %246 = dma.hbm_to_vmem [thread:$0]  %s239, 1280, %s241, [#allocation7], 128, 128, 8
        $region28: #{tpu_custom_call.1} parent=11 // pred_fallthru
          _
        // Predicated region
        $region29: #{tpu_custom_call.1} parent=11 // pred_check
          %p247 = pneg %p151
        $region30: #{tpu_custom_call.1} parent=11 // pred_check_branch
          %249 = sbr.rel (%p247) target = $region32
        $region31: #{tpu_custom_call.1} parent=11 // pred_region
          _
        $region32: #{tpu_custom_call.1} parent=11 // pred_fallthru
          _
        // Predicated region
        $region33: #{tpu_custom_call.1} parent=11 // pred_check
          %p250 = pneg %p172
        $region34: #{tpu_custom_call.1} parent=11 // pred_check_branch
          %252 = sbr.rel (%p250) target = $region36
        $region35: #{tpu_custom_call.1} parent=11 // pred_region
          _
        $region36: #{tpu_custom_call.1} parent=11 // pred_fallthru
          _
      $region12: #{tpu_custom_call.1} parent=5 // pred_fallthru
        _
      %p253 = scmp.lt.s32.totalorder %s20, 2
      // Predicated region
      $region37: #{tpu_custom_call.1} parent=5 // pred_check
        %p254 = pneg %p253
      $region38: #{tpu_custom_call.1} parent=5 // pred_check_branch
        %256 = sbr.rel (%p254) target = $region40
      $region39: #{tpu_custom_call.1} parent=5 // pred_region
        // Predicated region
        $region41: #{tpu_custom_call.1} parent=39 // pred_check
          %p257 = pneg %p40
        $region42: #{tpu_custom_call.1} parent=39 // pred_check_branch
          %259 = sbr.rel (%p257) target = $region44
        $region43: #{tpu_custom_call.1} parent=39 // pred_region
          %s260 = sand.u32 %s30, 1
          %s261 = scalar_lea.sflag [#allocation4], %s260
          %s262 = sand.u32 %s30, 1
          %s263 = smul.addr %s262, 32
          %s264 = scalar_lea.vmem [#allocation3], %s263
          %266 = vsyncadd %s261, 0
          %s267 = smul.addr %s20, 4
          %s268 = smul.addr %s267, 8
          %s269 = scalar_lea.hbm %s0, %s268
          %s270 = sshll.u32 %s269, 4
          %s271 = int_to_ptr.hbm [resolvable:$true] %s270
          %s272 = sshll.u32 %s264, 4
          %s273 = int_to_ptr.vmem [resolvable:$true] %s272
          %278 = dma.hbm_to_vmem [thread:$0]  %s271, 512, %s273, %s261, 256, 256, 16
        $region44: #{tpu_custom_call.1} parent=39 // pred_fallthru
          _
      $region40: #{tpu_custom_call.1} parent=5 // pred_fallthru
        _
      %p279 = scmp.le.s32.totalorder 1, %s20
      %p280 = scmp.lt.s32.totalorder %s20, 3
      %p281 = pnand %p279, %p280
      %p282 = pneg %p281
      // Predicated region
      $region45: #{tpu_custom_call.1} parent=5 // pred_check
        _
      $region46: #{tpu_custom_call.1} parent=5 // pred_check_branch
        %284 = sbr.rel (%p281) target = $region48
      $region47: #{tpu_custom_call.1} parent=5 // pred_region
        %s285 = ssub.s32 %s20, 1
        %s286 = sand.u32 %s33, 1
        %s287 = scalar_lea.sflag [#allocation4], %s286
        %s288 = sand.u32 %s33, 1
        %s289 = smul.addr %s288, 32
        %s290 = scalar_lea.vmem [#allocation3], %s289
        // Predicated region
        $region49: #{tpu_custom_call.1} parent=47 // pred_check
          %p291 = pneg %p46
        $region50: #{tpu_custom_call.1} parent=47 // pred_check_branch
          %293 = sbr.rel (%p291) target = $region52
        $region51: #{tpu_custom_call.1} parent=47 // pred_region
          %295 = dma.done %s287, 512
        $region52: #{tpu_custom_call.1} parent=47 // pred_fallthru
          _
        // Predicated region
        $region53: #{tpu_custom_call.1} parent=47 // pred_check
          %p296 = pneg %p67
        $region54: #{tpu_custom_call.1} parent=47 // pred_check_branch
          %298 = sbr.rel (%p296) target = $region56
        $region55: #{tpu_custom_call.1} parent=47 // pred_region
          %300 = dma.done [#allocation7], 1280
        $region56: #{tpu_custom_call.1} parent=47 // pred_fallthru
          _
        // Predicated region
        $region57: #{tpu_custom_call.1} parent=47 // pred_check
          %p301 = pneg %p130
        $region58: #{tpu_custom_call.1} parent=47 // pred_check_branch
          %303 = sbr.rel (%p301) target = $region60
        $region59: #{tpu_custom_call.1} parent=47 // pred_region
          %305 = dma.done [#allocation7], 1280
        $region60: #{tpu_custom_call.1} parent=47 // pred_fallthru
          _
        %s306 = sand.u32 %s33, 1
        %s307 = scalar_lea.sflag [#allocation4], %s306
        %s308 = sand.u32 %s33, 1
        %s309 = smul.addr %s308, 32
        %s310 = scalar_lea.vmem [#allocation3], %s309
        %p311 = pneg %p46
        %p312 = pneg %p43
        %p313 = pneg %p67
        %p314 = pneg %p64
        %p315 = pneg %p88
        %p316 = pneg %p85
        %p317 = pneg %p109
        %p318 = pneg %p106
        %p319 = pneg %p130
        %p320 = pneg %p127
        %p321 = pneg %p151
        %p322 = pneg %p148
        %p323 = pneg %p172
        %p324 = pneg %p169
        %p325 = pneg %p198
        %p326 = pneg %p195
        %s327 = sand.u32 %s185, 1
        %s328 = scalar_lea.sflag [#allocation5], %s327
        %s329 = sand.u32 %s185, 1
        %s330 = smul.addr %s329, 16
        %s331 = scalar_lea.vmem [#allocation9], %s330
        %v332 = vld [vmem:[%s290] sm:$0xff]
        %v333 = vld [vmem:[%s290 + $0x8] sm:$0xff]
        %v334 = vld [vmem:[%s290 + $0x10] sm:$0xff]
        %v335 = vld [vmem:[%s290 + $0x18] sm:$0xff]
        %v336 = vld [vmem:[#allocation6] sm:$0xff]
        %v337 = vld [vmem:[#allocation6 + $0x8] sm:$0xff]
        %s338 = scalar_lea.vmem [#allocation6], 16
        %v339 = vld [vmem:[%s338] sm:$0xff]
        %v340 = vld [vmem:[%s338 + $0x8] sm:$0xff]
        %345 = vrot.lane.b32.xlu0 %v332, 127
        %v346 = vpop.permute.xlu0 %345
        %347 = vrot.lane.b32.xlu0 %v333, 127
        %v348 = vpop.permute.xlu0 %347
        %349 = vrot.lane.b32.xlu0 %v334, 127
        %v350 = vpop.permute.xlu0 %349
        %351 = vrot.lane.b32.xlu0 %v335, 127
        %v352 = vpop.permute.xlu0 %351
        %vm353 = vcmask 1039360
        %v354 = vsel %vm353, %v346, %v348
        %v355 = vsel %vm353, %v350, %v352
        %vm360 = vcmask 130048
        %v362 = vsel %vm360, %v339, 0
        %v365 = vsel %vm360, %v340, 0
        %367 = vmatpush.msra.mxu0 0.0
        %368 = vmatpush.msra.mxu0 0.0
        %369 = vmatpush.msra.mxu0 0.0
        %370 = vmatpush.msra.mxu0 0.0
        %371 = vmatpush.msra.mxu0 0.0
        %372 = vmatpush.msra.mxu0 0.0
        %373 = vmatpush.msra.mxu0 0.0
        %374 = vmatpush.msra.mxu0 0.0
        %375 = vmatpush.msra.mxu0 0.0
        %376 = vmatpush.msra.mxu0 0.0
        %377 = vmatpush.msra.mxu0 0.0
        %378 = vmatpush.msra.mxu0 0.0
        %379 = vmatpush.msra.mxu0 0.0
        %380 = vmatpush.msra.mxu0 0.0
        %381 = vmatpush.msra.mxu0 %v355
        %382 = vmatpush.msra.mxu0 %v354
        %383 = vmatmul.f32.gmra.mxu0 %v362
        %v384 = vpop.f32.mrf.mxu0
        %v385 = vadd.f32 0.0, %v384
        %386 = vmatmul.f32.gmra.mxu0 %v365
        %v387 = vpop.f32.mrf.mxu0
        %v388 = vadd.f32 0.0, %v387
        %389 = vdwg.mxu0
        %390 = vmatpush.msra.mxu0 0.0
        %391 = vmatpush.msra.mxu0 0.0
        %392 = vmatpush.msra.mxu0 0.0
        %393 = vmatpush.msra.mxu0 0.0
        %394 = vmatpush.msra.mxu0 0.0
        %395 = vmatpush.msra.mxu0 0.0
        %396 = vmatpush.msra.mxu0 0.0
        %397 = vmatpush.msra.mxu0 0.0
        %398 = vmatpush.msra.mxu0 0.0
        %399 = vmatpush.msra.mxu0 0.0
        %400 = vmatpush.msra.mxu0 0.0
        %401 = vmatpush.msra.mxu0 0.0
        %402 = vmatpush.msra.mxu0 0.0
        %403 = vmatpush.msra.mxu0 0.0
        %404 = vmatpush.msra.mxu0 %v352
        %405 = vmatpush.msra.mxu0 %v348
        %406 = vmatmul.f32.gmra.mxu0 %v362
        %v407 = vpop.f32.mrf.mxu0
        %v408 = vadd.f32 0.0, %v407
        %409 = vmatmul.f32.gmra.mxu0 %v365
        %v410 = vpop.f32.mrf.mxu0
        %v411 = vadd.f32 0.0, %v410
        %412 = vdwg.mxu0
        %v414 = vsel %vm360, %v336, 0
        %v417 = vsel %vm360, %v337, 0
        %419 = vmatpush.msra.mxu0 0.0
        %420 = vmatpush.msra.mxu0 0.0
        %421 = vmatpush.msra.mxu0 0.0
        %422 = vmatpush.msra.mxu0 0.0
        %423 = vmatpush.msra.mxu0 0.0
        %424 = vmatpush.msra.mxu0 0.0
        %425 = vmatpush.msra.mxu0 0.0
        %426 = vmatpush.msra.mxu0 0.0
        %427 = vmatpush.msra.mxu0 0.0
        %428 = vmatpush.msra.mxu0 0.0
        %429 = vmatpush.msra.mxu0 0.0
        %430 = vmatpush.msra.mxu0 0.0
        %431 = vmatpush.msra.mxu0 0.0
        %432 = vmatpush.msra.mxu0 0.0
        %433 = vmatpush.msra.mxu0 %v334
        %434 = vmatpush.msra.mxu0 %v332
        %435 = vmatmul.f32.gmra.mxu0 %v414
        %v436 = vpop.f32.mrf.mxu0
        %v437 = vadd.f32 %v385, %v436
        %438 = vmatmul.f32.gmra.mxu0 %v417
        %v439 = vpop.f32.mrf.mxu0
        %v440 = vadd.f32 %v388, %v439
        %441 = vdwg.mxu0
        %442 = vmatpush.msra.mxu0 0.0
        %443 = vmatpush.msra.mxu0 0.0
        %444 = vmatpush.msra.mxu0 0.0
        %445 = vmatpush.msra.mxu0 0.0
        %446 = vmatpush.msra.mxu0 0.0
        %447 = vmatpush.msra.mxu0 0.0
        %448 = vmatpush.msra.mxu0 0.0
        %449 = vmatpush.msra.mxu0 0.0
        %450 = vmatpush.msra.mxu0 0.0
        %451 = vmatpush.msra.mxu0 0.0
        %452 = vmatpush.msra.mxu0 0.0
        %453 = vmatpush.msra.mxu0 0.0
        %454 = vmatpush.msra.mxu0 0.0
        %455 = vmatpush.msra.mxu0 0.0
        %456 = vmatpush.msra.mxu0 %v335
        %457 = vmatpush.msra.mxu0 %v333
        %458 = vmatmul.f32.gmra.mxu0 %v414
        %v459 = vpop.f32.mrf.mxu0
        %v460 = vadd.f32 %v408, %v459
        %461 = vmatmul.f32.gmra.mxu0 %v417
        %v462 = vpop.f32.mrf.mxu0
        %v463 = vadd.f32 %v411, %v462
        %464 = vdwg.mxu0
        %s465 = scalar_lea.vmem [#allocation6], 32
        %v466 = vld [vmem:[%s465] sm:$0xff]
        %v467 = vld [vmem:[%s465 + $0x8] sm:$0xff]
        %468 = vrot.lane.b32.xlu0 %v332, 126
        %v469 = vpop.permute.xlu0 %468
        %470 = vrot.lane.b32.xlu0 %v333, 126
        %v471 = vpop.permute.xlu0 %470
        %472 = vrot.lane.b32.xlu0 %v334, 126
        %v473 = vpop.permute.xlu0 %472
        %474 = vrot.lane.b32.xlu0 %v335, 126
        %v475 = vpop.permute.xlu0 %474
        %vm476 = vcmask 1031168
        %v477 = vsel %vm476, %v469, %v471
        %v478 = vsel %vm476, %v473, %v475
        %v484 = vsel %vm360, %v466, 0
        %v487 = vsel %vm360, %v467, 0
        %489 = vmatpush.msra.mxu0 0.0
        %490 = vmatpush.msra.mxu0 0.0
        %491 = vmatpush.msra.mxu0 0.0
        %492 = vmatpush.msra.mxu0 0.0
        %493 = vmatpush.msra.mxu0 0.0
        %494 = vmatpush.msra.mxu0 0.0
        %495 = vmatpush.msra.mxu0 0.0
        %496 = vmatpush.msra.mxu0 0.0
        %497 = vmatpush.msra.mxu0 0.0
        %498 = vmatpush.msra.mxu0 0.0
        %499 = vmatpush.msra.mxu0 0.0
        %500 = vmatpush.msra.mxu0 0.0
        %501 = vmatpush.msra.mxu0 0.0
        %502 = vmatpush.msra.mxu0 0.0
        %503 = vmatpush.msra.mxu0 %v478
        %504 = vmatpush.msra.mxu0 %v477
        %505 = vmatmul.f32.gmra.mxu0 %v484
        %v506 = vpop.f32.mrf.mxu0
        %v507 = vadd.f32 0.0, %v506
        %508 = vmatmul.f32.gmra.mxu0 %v487
        %v509 = vpop.f32.mrf.mxu0
        %v510 = vadd.f32 0.0, %v509
        %511 = vdwg.mxu0
        %512 = vmatpush.msra.mxu0 0.0
        %513 = vmatpush.msra.mxu0 0.0
        %514 = vmatpush.msra.mxu0 0.0
        %515 = vmatpush.msra.mxu0 0.0
        %516 = vmatpush.msra.mxu0 0.0
        %517 = vmatpush.msra.mxu0 0.0
        %518 = vmatpush.msra.mxu0 0.0
        %519 = vmatpush.msra.mxu0 0.0
        %520 = vmatpush.msra.mxu0 0.0
        %521 = vmatpush.msra.mxu0 0.0
        %522 = vmatpush.msra.mxu0 0.0
        %523 = vmatpush.msra.mxu0 0.0
        %524 = vmatpush.msra.mxu0 0.0
        %525 = vmatpush.msra.mxu0 0.0
        %526 = vmatpush.msra.mxu0 %v475
        %527 = vmatpush.msra.mxu0 %v471
        %528 = vmatmul.f32.gmra.mxu0 %v484
        %v529 = vpop.f32.mrf.mxu0
        %v530 = vadd.f32 0.0, %v529
        %531 = vmatmul.f32.gmra.mxu0 %v487
        %v532 = vpop.f32.mrf.mxu0
        %v533 = vadd.f32 0.0, %v532
        %534 = vdwg.mxu0
        %v535 = vadd.f32 %v437, %v507
        %v536 = vadd.f32 %v460, %v530
        %v537 = vadd.f32 %v440, %v510
        %v538 = vadd.f32 %v463, %v533
        %s539 = scalar_lea.vmem [#allocation6], 48
        %v540 = vld [vmem:[%s539] sm:$0xff]
        %v541 = vld [vmem:[%s539 + $0x8] sm:$0xff]
        %542 = vrot.lane.b32.xlu0 %v332, 125
        %v543 = vpop.permute.xlu0 %542
        %544 = vrot.lane.b32.xlu0 %v333, 125
        %v545 = vpop.permute.xlu0 %544
        %546 = vrot.lane.b32.xlu0 %v334, 125
        %v547 = vpop.permute.xlu0 %546
        %548 = vrot.lane.b32.xlu0 %v335, 125
        %v549 = vpop.permute.xlu0 %548
        %vm550 = vcmask 1022976
        %v551 = vsel %vm550, %v543, %v545
        %v552 = vsel %vm550, %v547, %v549
        %v558 = vsel %vm360, %v540, 0
        %v561 = vsel %vm360, %v541, 0
        %563 = vmatpush.msra.mxu0 0.0
        %564 = vmatpush.msra.mxu0 0.0
        %565 = vmatpush.msra.mxu0 0.0
        %566 = vmatpush.msra.mxu0 0.0
        %567 = vmatpush.msra.mxu0 0.0
        %568 = vmatpush.msra.mxu0 0.0
        %569 = vmatpush.msra.mxu0 0.0
        %570 = vmatpush.msra.mxu0 0.0
        %571 = vmatpush.msra.mxu0 0.0
        %572 = vmatpush.msra.mxu0 0.0
        %573 = vmatpush.msra.mxu0 0.0
        %574 = vmatpush.msra.mxu0 0.0
        %575 = vmatpush.msra.mxu0 0.0
        %576 = vmatpush.msra.mxu0 0.0
        %577 = vmatpush.msra.mxu0 %v552
        %578 = vmatpush.msra.mxu0 %v551
        %579 = vmatmul.f32.gmra.mxu0 %v558
        %v580 = vpop.f32.mrf.mxu0
        %v581 = vadd.f32 0.0, %v580
        %582 = vmatmul.f32.gmra.mxu0 %v561
        %v583 = vpop.f32.mrf.mxu0
        %v584 = vadd.f32 0.0, %v583
        %585 = vdwg.mxu0
        %586 = vmatpush.msra.mxu0 0.0
        %587 = vmatpush.msra.mxu0 0.0
        %588 = vmatpush.msra.mxu0 0.0
        %589 = vmatpush.msra.mxu0 0.0
        %590 = vmatpush.msra.mxu0 0.0
        %591 = vmatpush.msra.mxu0 0.0
        %592 = vmatpush.msra.mxu0 0.0
        %593 = vmatpush.msra.mxu0 0.0
        %594 = vmatpush.msra.mxu0 0.0
        %595 = vmatpush.msra.mxu0 0.0
        %596 = vmatpush.msra.mxu0 0.0
        %597 = vmatpush.msra.mxu0 0.0
        %598 = vmatpush.msra.mxu0 0.0
        %599 = vmatpush.msra.mxu0 0.0
        %600 = vmatpush.msra.mxu0 %v549
        %601 = vmatpush.msra.mxu0 %v545
        %602 = vmatmul.f32.gmra.mxu0 %v558
        %v603 = vpop.f32.mrf.mxu0
        %v604 = vadd.f32 0.0, %v603
        %605 = vmatmul.f32.gmra.mxu0 %v561
        %v606 = vpop.f32.mrf.mxu0
        %v607 = vadd.f32 0.0, %v606
        %608 = vdwg.mxu0
        %v609 = vadd.f32 %v535, %v581
        %v610 = vadd.f32 %v536, %v604
        %v611 = vadd.f32 %v537, %v584
        %v612 = vadd.f32 %v538, %v607
        %s613 = scalar_lea.vmem [#allocation6], 64
        %v614 = vld [vmem:[%s613] sm:$0xff]
        %v615 = vld [vmem:[%s613 + $0x8] sm:$0xff]
        %616 = vrot.lane.b32.xlu0 %v332, 124
        %v617 = vpop.permute.xlu0 %616
        %618 = vrot.lane.b32.xlu0 %v333, 124
        %v619 = vpop.permute.xlu0 %618
        %620 = vrot.lane.b32.xlu0 %v334, 124
        %v621 = vpop.permute.xlu0 %620
        %622 = vrot.lane.b32.xlu0 %v335, 124
        %v623 = vpop.permute.xlu0 %622
        %vm624 = vcmask 1014784
        %v625 = vsel %vm624, %v617, %v619
        %v626 = vsel %vm624, %v621, %v623
        %v632 = vsel %vm360, %v614, 0
        %v635 = vsel %vm360, %v615, 0
        %637 = vmatpush.msra.mxu0 0.0
        %638 = vmatpush.msra.mxu0 0.0
        %639 = vmatpush.msra.mxu0 0.0
        %640 = vmatpush.msra.mxu0 0.0
        %641 = vmatpush.msra.mxu0 0.0
        %642 = vmatpush.msra.mxu0 0.0
        %643 = vmatpush.msra.mxu0 0.0
        %644 = vmatpush.msra.mxu0 0.0
        %645 = vmatpush.msra.mxu0 0.0
        %646 = vmatpush.msra.mxu0 0.0
        %647 = vmatpush.msra.mxu0 0.0
        %648 = vmatpush.msra.mxu0 0.0
        %649 = vmatpush.msra.mxu0 0.0
        %650 = vmatpush.msra.mxu0 0.0
        %651 = vmatpush.msra.mxu0 %v626
        %652 = vmatpush.msra.mxu0 %v625
        %653 = vmatmul.f32.gmra.mxu0 %v632
        %v654 = vpop.f32.mrf.mxu0
        %v655 = vadd.f32 0.0, %v654
        %656 = vmatmul.f32.gmra.mxu0 %v635
        %v657 = vpop.f32.mrf.mxu0
        %v658 = vadd.f32 0.0, %v657
        %659 = vdwg.mxu0
        %660 = vmatpush.msra.mxu0 0.0
        %661 = vmatpush.msra.mxu0 0.0
        %662 = vmatpush.msra.mxu0 0.0
        %663 = vmatpush.msra.mxu0 0.0
        %664 = vmatpush.msra.mxu0 0.0
        %665 = vmatpush.msra.mxu0 0.0
        %666 = vmatpush.msra.mxu0 0.0
        %667 = vmatpush.msra.mxu0 0.0
        %668 = vmatpush.msra.mxu0 0.0
        %669 = vmatpush.msra.mxu0 0.0
        %670 = vmatpush.msra.mxu0 0.0
        %671 = vmatpush.msra.mxu0 0.0
        %672 = vmatpush.msra.mxu0 0.0
        %673 = vmatpush.msra.mxu0 0.0
        %674 = vmatpush.msra.mxu0 %v623
        %675 = vmatpush.msra.mxu0 %v619
        %676 = vmatmul.f32.gmra.mxu0 %v632
        %v677 = vpop.f32.mrf.mxu0
        %v678 = vadd.f32 0.0, %v677
        %679 = vmatmul.f32.gmra.mxu0 %v635
        %v680 = vpop.f32.mrf.mxu0
        %v681 = vadd.f32 0.0, %v680
        %682 = vdwg.mxu0
        %v683 = vadd.f32 %v609, %v655
        %v684 = vadd.f32 %v610, %v678
        %v685 = vadd.f32 %v611, %v658
        %v686 = vadd.f32 %v612, %v681
        %v687 = vld [vmem:[%s2] sm:$0xff]
        %v688 = vld [vmem:[%s2 + $0x8] sm:$0xff]
        %690 = vset.pattern.permute.xlu0 0
        %691 = vperm.xlu0 %690, %v687
        %v692 = vpop.permute.xlu0 %691
        %695 = vset.pattern.permute.xlu0 0
        %696 = vperm.xlu0 %695, %v688
        %v697 = vpop.permute.xlu0 %696
        %v699 = vmul.f32 %v683, %v692
        %v700 = vmul.f32 %v684, %v692
        %v701 = vmul.f32 %v685, %v697
        %v702 = vmul.f32 %v686, %v697
        %v703 = vld [vmem:[%s3] sm:$0xff]
        %v704 = vld [vmem:[%s3 + $0x8] sm:$0xff]
        %706 = vset.pattern.permute.xlu0 0
        %707 = vperm.xlu0 %706, %v703
        %v708 = vpop.permute.xlu0 %707
        %711 = vset.pattern.permute.xlu0 0
        %712 = vperm.xlu0 %711, %v704
        %v713 = vpop.permute.xlu0 %712
        %v715 = vadd.f32 %v699, %v708
        %v716 = vadd.f32 %v700, %v708
        %v717 = vadd.f32 %v701, %v713
        %v718 = vadd.f32 %v702, %v713
        %v719 = vmax.f32 %v715, 0.0
        %v720 = vmax.f32 %v716, 0.0
        %v721 = vmax.f32 %v717, 0.0
        %v722 = vmax.f32 %v718, 0.0
        %723 = vst [vmem:[#allocation2] sm:$0xff] 0.0
        %vm724 = vcmask 31744
        %725 = vst.msk [vmem:[#allocation2 + $0x8] sm:$0xff] %vm724, 0.0
        %726 = vst [vmem:[#allocation2 + $0x10] sm:$0xff] 0.0
        %727 = vst.msk [vmem:[#allocation2 + $0x18] sm:$0xff] %vm724, 0.0
        %732 = vrot.lane.b32.xlu0 %v719, 1
        %v733 = vpop.permute.xlu0 %732
        %734 = vrot.lane.b32.xlu0 %v720, 1
        %v735 = vpop.permute.xlu0 %734
        %736 = vrot.lane.b32.xlu0 %v721, 1
        %v737 = vpop.permute.xlu0 %736
        %738 = vrot.lane.b32.xlu0 %v722, 1
        %v739 = vpop.permute.xlu0 %738
        %vm740 = vcmask 7168
        %v741 = vsel %vm740, %v733, %v735
        %v742 = vsel %vm740, %v737, %v739
        %vm747 = vcmask 1047560
        %748 = vst.msk [vmem:[#allocation2] sm:$0xff] %vm747, %v733
        %vm749 = vcmask 23552
        %750 = vst.msk [vmem:[#allocation2 + $0x8] sm:$0xff] %vm749, %v741
        %751 = vst.msk [vmem:[#allocation2 + $0x10] sm:$0xff] %vm747, %v737
        %752 = vst.msk [vmem:[#allocation2 + $0x18] sm:$0xff] %vm749, %v742
        %v753 = vld [vmem:[#allocation8] sm:$0xff]
        %v754 = vld [vmem:[#allocation8 + $0x8] sm:$0xff]
        %v755 = vld [vmem:[#allocation2] sm:$0xff]
        %v756 = vld [vmem:[#allocation2 + $0x10] sm:$0xff]
        %s757 = scalar_lea.vmem [#allocation8], 16
        %v758 = vld [vmem:[%s757] sm:$0xff]
        %v759 = vld [vmem:[%s757 + $0x8] sm:$0xff]
        %v760 = vld [vmem:[#allocation2 + $0x8] sm:$0xff]
        %v761 = vld [vmem:[#allocation2 + $0x18] sm:$0xff]
        %766 = vrot.lane.b32.xlu0 %v755, 127
        %v767 = vpop.permute.xlu0 %766
        %768 = vrot.lane.b32.xlu0 %v760, 127
        %v769 = vpop.permute.xlu0 %768
        %770 = vrot.lane.b32.xlu0 %v756, 127
        %v771 = vpop.permute.xlu0 %770
        %772 = vrot.lane.b32.xlu0 %v761, 127
        %v773 = vpop.permute.xlu0 %772
        %v774 = vsel %vm353, %v767, %v769
        %v775 = vsel %vm353, %v771, %v773
        %v779 = vsel %vm360, %v758, 0
        %v782 = vsel %vm360, %v759, 0
        %784 = vmatpush.msra.mxu0 0.0
        %785 = vmatpush.msra.mxu0 0.0
        %786 = vmatpush.msra.mxu0 0.0
        %787 = vmatpush.msra.mxu0 0.0
        %788 = vmatpush.msra.mxu0 0.0
        %789 = vmatpush.msra.mxu0 0.0
        %790 = vmatpush.msra.mxu0 0.0
        %791 = vmatpush.msra.mxu0 0.0
        %792 = vmatpush.msra.mxu0 0.0
        %793 = vmatpush.msra.mxu0 0.0
        %794 = vmatpush.msra.mxu0 0.0
        %795 = vmatpush.msra.mxu0 0.0
        %796 = vmatpush.msra.mxu0 0.0
        %797 = vmatpush.msra.mxu0 0.0
        %798 = vmatpush.msra.mxu0 %v775
        %799 = vmatpush.msra.mxu0 %v774
        %800 = vmatmul.f32.gmra.mxu0 %v779
        %v801 = vpop.f32.mrf.mxu0
        %v802 = vadd.f32 0.0, %v801
        %803 = vmatmul.f32.gmra.mxu0 %v782
        %v804 = vpop.f32.mrf.mxu0
        %v805 = vadd.f32 0.0, %v804
        %806 = vdwg.mxu0
        %v808 = vsel %vm360, %v753, 0
        %v811 = vsel %vm360, %v754, 0
        %813 = vmatpush.msra.mxu0 0.0
        %814 = vmatpush.msra.mxu0 0.0
        %815 = vmatpush.msra.mxu0 0.0
        %816 = vmatpush.msra.mxu0 0.0
        %817 = vmatpush.msra.mxu0 0.0
        %818 = vmatpush.msra.mxu0 0.0
        %819 = vmatpush.msra.mxu0 0.0
        %820 = vmatpush.msra.mxu0 0.0
        %821 = vmatpush.msra.mxu0 0.0
        %822 = vmatpush.msra.mxu0 0.0
        %823 = vmatpush.msra.mxu0 0.0
        %824 = vmatpush.msra.mxu0 0.0
        %825 = vmatpush.msra.mxu0 0.0
        %826 = vmatpush.msra.mxu0 0.0
        %827 = vmatpush.msra.mxu0 %v756
        %828 = vmatpush.msra.mxu0 %v755
        %829 = vmatmul.f32.gmra.mxu0 %v808
        %v830 = vpop.f32.mrf.mxu0
        %v831 = vadd.f32 %v802, %v830
        %832 = vmatmul.f32.gmra.mxu0 %v811
        %v833 = vpop.f32.mrf.mxu0
        %v834 = vadd.f32 %v805, %v833
        %835 = vdwg.mxu0
        %s836 = scalar_lea.vmem [#allocation8], 32
        %v837 = vld [vmem:[%s836] sm:$0xff]
        %v838 = vld [vmem:[%s836 + $0x8] sm:$0xff]
        %839 = vrot.lane.b32.xlu0 %v755, 126
        %v840 = vpop.permute.xlu0 %839
        %841 = vrot.lane.b32.xlu0 %v760, 126
        %v842 = vpop.permute.xlu0 %841
        %843 = vrot.lane.b32.xlu0 %v756, 126
        %v844 = vpop.permute.xlu0 %843
        %845 = vrot.lane.b32.xlu0 %v761, 126
        %v846 = vpop.permute.xlu0 %845
        %v847 = vsel %vm476, %v840, %v842
        %v848 = vsel %vm476, %v844, %v846
        %v852 = vsel %vm360, %v837, 0
        %v855 = vsel %vm360, %v838, 0
        %857 = vmatpush.msra.mxu0 0.0
        %858 = vmatpush.msra.mxu0 0.0
        %859 = vmatpush.msra.mxu0 0.0
        %860 = vmatpush.msra.mxu0 0.0
        %861 = vmatpush.msra.mxu0 0.0
        %862 = vmatpush.msra.mxu0 0.0
        %863 = vmatpush.msra.mxu0 0.0
        %864 = vmatpush.msra.mxu0 0.0
        %865 = vmatpush.msra.mxu0 0.0
        %866 = vmatpush.msra.mxu0 0.0
        %867 = vmatpush.msra.mxu0 0.0
        %868 = vmatpush.msra.mxu0 0.0
        %869 = vmatpush.msra.mxu0 0.0
        %870 = vmatpush.msra.mxu0 0.0
        %871 = vmatpush.msra.mxu0 %v848
        %872 = vmatpush.msra.mxu0 %v847
        %873 = vmatmul.f32.gmra.mxu0 %v852
        %v874 = vpop.f32.mrf.mxu0
        %v875 = vadd.f32 0.0, %v874
        %876 = vmatmul.f32.gmra.mxu0 %v855
        %v877 = vpop.f32.mrf.mxu0
        %v878 = vadd.f32 0.0, %v877
        %879 = vdwg.mxu0
        %v880 = vadd.f32 %v831, %v875
        %v881 = vadd.f32 %v834, %v878
        %s882 = scalar_lea.vmem [#allocation8], 48
        %v883 = vld [vmem:[%s882] sm:$0xff]
        %v884 = vld [vmem:[%s882 + $0x8] sm:$0xff]
        %885 = vrot.lane.b32.xlu0 %v755, 125
        %v886 = vpop.permute.xlu0 %885
        %887 = vrot.lane.b32.xlu0 %v760, 125
        %v888 = vpop.permute.xlu0 %887
        %889 = vrot.lane.b32.xlu0 %v756, 125
        %v890 = vpop.permute.xlu0 %889
        %891 = vrot.lane.b32.xlu0 %v761, 125
        %v892 = vpop.permute.xlu0 %891
        %v893 = vsel %vm550, %v886, %v888
        %v894 = vsel %vm550, %v890, %v892
        %v898 = vsel %vm360, %v883, 0
        %v901 = vsel %vm360, %v884, 0
        %903 = vmatpush.msra.mxu0 0.0
        %904 = vmatpush.msra.mxu0 0.0
        %905 = vmatpush.msra.mxu0 0.0
        %906 = vmatpush.msra.mxu0 0.0
        %907 = vmatpush.msra.mxu0 0.0
        %908 = vmatpush.msra.mxu0 0.0
        %909 = vmatpush.msra.mxu0 0.0
        %910 = vmatpush.msra.mxu0 0.0
        %911 = vmatpush.msra.mxu0 0.0
        %912 = vmatpush.msra.mxu0 0.0
        %913 = vmatpush.msra.mxu0 0.0
        %914 = vmatpush.msra.mxu0 0.0
        %915 = vmatpush.msra.mxu0 0.0
        %916 = vmatpush.msra.mxu0 0.0
        %917 = vmatpush.msra.mxu0 %v894
        %918 = vmatpush.msra.mxu0 %v893
        %919 = vmatmul.f32.gmra.mxu0 %v898
        %v920 = vpop.f32.mrf.mxu0
        %v921 = vadd.f32 0.0, %v920
        %922 = vmatmul.f32.gmra.mxu0 %v901
        %v923 = vpop.f32.mrf.mxu0
        %v924 = vadd.f32 0.0, %v923
        %925 = vdwg.mxu0
        %v926 = vadd.f32 %v880, %v921
        %v927 = vadd.f32 %v881, %v924
        %s928 = scalar_lea.vmem [#allocation8], 64
        %v929 = vld [vmem:[%s928] sm:$0xff]
        %v930 = vld [vmem:[%s928 + $0x8] sm:$0xff]
        %931 = vrot.lane.b32.xlu0 %v755, 124
        %v932 = vpop.permute.xlu0 %931
        %933 = vrot.lane.b32.xlu0 %v760, 124
        %v934 = vpop.permute.xlu0 %933
        %935 = vrot.lane.b32.xlu0 %v756, 124
        %v936 = vpop.permute.xlu0 %935
        %937 = vrot.lane.b32.xlu0 %v761, 124
        %v938 = vpop.permute.xlu0 %937
        %v939 = vsel %vm624, %v932, %v934
        %v940 = vsel %vm624, %v936, %v938
        %v944 = vsel %vm360, %v929, 0
        %v947 = vsel %vm360, %v930, 0
        %949 = vmatpush.msra.mxu0 0.0
        %950 = vmatpush.msra.mxu0 0.0
        %951 = vmatpush.msra.mxu0 0.0
        %952 = vmatpush.msra.mxu0 0.0
        %953 = vmatpush.msra.mxu0 0.0
        %954 = vmatpush.msra.mxu0 0.0
        %955 = vmatpush.msra.mxu0 0.0
        %956 = vmatpush.msra.mxu0 0.0
        %957 = vmatpush.msra.mxu0 0.0
        %958 = vmatpush.msra.mxu0 0.0
        %959 = vmatpush.msra.mxu0 0.0
        %960 = vmatpush.msra.mxu0 0.0
        %961 = vmatpush.msra.mxu0 0.0
        %962 = vmatpush.msra.mxu0 0.0
        %963 = vmatpush.msra.mxu0 %v940
        %964 = vmatpush.msra.mxu0 %v939
        %965 = vmatmul.f32.gmra.mxu0 %v944
        %v966 = vpop.f32.mrf.mxu0
        %v967 = vadd.f32 0.0, %v966
        %968 = vmatmul.f32.gmra.mxu0 %v947
        %v969 = vpop.f32.mrf.mxu0
        %v970 = vadd.f32 0.0, %v969
        %971 = vdwg.mxu0
        %v972 = vadd.f32 %v926, %v967
        %v973 = vadd.f32 %v927, %v970
        %v974 = vld [vmem:[%s5] sm:$0xff]
        %v975 = vld [vmem:[%s5 + $0x8] sm:$0xff]
        %977 = vset.pattern.permute.xlu0 0
        %978 = vperm.xlu0 %977, %v974
        %v979 = vpop.permute.xlu0 %978
        %982 = vset.pattern.permute.xlu0 0
        %983 = vperm.xlu0 %982, %v975
        %v984 = vpop.permute.xlu0 %983
        %v986 = vmul.f32 %v972, %v979
        %v987 = vmul.f32 %v973, %v984
        %v988 = vld [vmem:[%s6] sm:$0xff]
        %v989 = vld [vmem:[%s6 + $0x8] sm:$0xff]
        %991 = vset.pattern.permute.xlu0 0
        %992 = vperm.xlu0 %991, %v988
        %v993 = vpop.permute.xlu0 %992
        %996 = vset.pattern.permute.xlu0 0
        %997 = vperm.xlu0 %996, %v989
        %v998 = vpop.permute.xlu0 %997
        %v1000 = vadd.f32 %v986, %v993
        %v1001 = vadd.f32 %v987, %v998
        %v1002 = vmax.f32 %v1000, 0.0
        %v1003 = vmax.f32 %v1001, 0.0
        %1006 = vrot.lane.b32.xlu0 %v1002, 1
        %v1007 = vpop.permute.xlu0 %1006
        %1008 = vrot.lane.b32.xlu0 %v1003, 1
        %v1009 = vpop.permute.xlu0 %1008
        %v1012 = vadd.f32 %v332, %v1007
        %v1013 = vadd.f32 %v333, %v1007
        %v1014 = vadd.f32 %v334, %v1009
        %v1015 = vadd.f32 %v335, %v1009
        %v1016 = vmax.f32 %v1012, 0.0
        %v1017 = vmax.f32 %v1013, 0.0
        %v1018 = vmax.f32 %v1014, 0.0
        %v1019 = vmax.f32 %v1015, 0.0
        %1024 = vrot.lane.b32.xlu0 %v1016, 127
        %v1025 = vpop.permute.xlu0 %1024
        %1026 = vrot.lane.b32.xlu0 %v1017, 127
        %v1027 = vpop.permute.xlu0 %1026
        %1028 = vrot.lane.b32.xlu0 %v1018, 127
        %v1029 = vpop.permute.xlu0 %1028
        %1030 = vrot.lane.b32.xlu0 %v1019, 127
        %v1031 = vpop.permute.xlu0 %1030
        %v1032 = vsel %vm353, %v1025, %v1027
        %v1033 = vsel %vm353, %v1029, %v1031
        %1036 = vst [vmem:[%s331] sm:$0xff] %v1032
        %1037 = vst [vmem:[%s331 + $0x8] sm:$0xff] %v1033
        %s1038 = sand.u32 %s185, 1
        %s1039 = scalar_lea.sflag [#allocation5], %s1038
        %s1040 = sand.u32 %s185, 1
        %s1041 = smul.addr %s1040, 16
        %s1042 = scalar_lea.vmem [#allocation9], %s1041
        // Predicated region
        $region61: #{tpu_custom_call.1} parent=47 // pred_check
          %p1043 = pneg %p195
        $region62: #{tpu_custom_call.1} parent=47 // pred_check_branch
          %1045 = sbr.rel (%p1043) target = $region64
        $region63: #{tpu_custom_call.1} parent=47 // pred_region
          %1047 = vsyncadd %s1039, 0
          %s1048 = smul.addr %s25, 2
          %s1049 = smul.addr %s1048, 8
          %s1050 = scalar_lea.hbm %s7, %s1049
          %s1051 = sshll.u32 %s1042, 4
          %s1052 = int_to_ptr.vmem [resolvable:$true] %s1051
          %s1053 = sshll.u32 %s1050, 4
          %s1054 = int_to_ptr.hbm [resolvable:$true] %s1053
          %1059 = dma.vmem_to_hbm [thread:$0]  %s1052, 256, %s1054, %s1039, 128, 128, 8
        $region64: #{tpu_custom_call.1} parent=47 // pred_fallthru
          _
      $region48: #{tpu_custom_call.1} parent=5 // pred_fallthru
        _
      %p1060 = scmp.le.s32.totalorder 2, %s20
      // Predicated region
      $region65: #{tpu_custom_call.1} parent=5 // pred_check
        %p1061 = pneg %p1060
      $region66: #{tpu_custom_call.1} parent=5 // pred_check_branch
        %1063 = sbr.rel (%p1061) target = $region68
      $region67: #{tpu_custom_call.1} parent=5 // pred_region
        %s1064 = ssub.s32 %s20, 2
        // Predicated region
        $region69: #{tpu_custom_call.1} parent=67 // pred_check
          %p1065 = pneg %p201
        $region70: #{tpu_custom_call.1} parent=67 // pred_check_branch
          %1067 = sbr.rel (%p1065) target = $region72
        $region71: #{tpu_custom_call.1} parent=67 // pred_region
          %s1068 = sand.u32 %s186, 1
          %s1069 = scalar_lea.sflag [#allocation5], %s1068
          %s1070 = sand.u32 %s186, 1
          %s1071 = smul.addr %s1070, 16
          %s1072 = scalar_lea.vmem [#allocation9], %s1071
          %1074 = dma.done %s1069, 256
        $region72: #{tpu_custom_call.1} parent=67 // pred_fallthru
          _
      $region68: #{tpu_custom_call.1} parent=5 // pred_fallthru
        _
    $region6: #{tpu_custom_call.1} parent=1 // loop_footer
      %s24 = sadd.s32 1, %s20
    $region7: #{tpu_custom_call.1} parent=1 // loop_footer_branch
      %19 = sbr.rel target = $region3
    $region8: #{tpu_custom_call.1} parent=1 // loop_exit
      _
    %1075 = vsyncpa [#allocation4], 1
    %s1076 = scalar_lea.sflag [#allocation4], 1
    %1077 = vsyncpa %s1076, 1
    %1078 = vsyncpa [#allocation7], 1
    %1079 = vsyncpa [#allocation5], 1
    %s1080 = scalar_lea.sflag [#allocation5], 1
    %1081 = vsyncpa %s1080, 1

</llo_original>
